<compile_context>
chip_gen: v7x
topology: tpu7x:2x2x1
jax: 0.10.0
libtpu: 0.0.40
codegen_flags: <defaults>
</compile_context>

<pallas_src>
import functools

import jax
import jax.numpy as jnp
from jax import lax
from jax.experimental import pallas as pl
from jax.experimental.pallas import tpu as pltpu

N_FEATURES = 8        # reward_event_mean_matrix.shape[1]
HIDDEN = 100
HIDDEN_PAD = 128      # zero-padded hidden dim (one full lane tile)
LEAKY_SLOPE = 0.01    # torch.nn.LeakyReLU default negative_slope


def _round_up(x, m):
    return ((x + m - 1) // m) * m


def _cdiv(a, b):
    return -(-a // b)


def _mlp_softmax_kernel(x_ref, w1t_ref, b1_ref, w2_ref, b2_ref, ot_ref):
    # x_ref:   [TB, 8]   f32   (batch tile in the natural [B, 8] layout)
    # w1t_ref: [8, 128]  bf16  (W1^T: in x out, hidden zero-padded)
    # b1_ref:  [1, 128]  bf16
    # w2_ref:  [8, 128]  bf16  (torch layout: out x in, hidden zero-padded)
    # b2_ref:  [8, 1]    f32
    # ot_ref:  [8, TB]   bf16  (feature-major, lane-dense output tile)
    xb = x_ref[...].astype(jnp.bfloat16)                               # [TB, 8]

    # Linear(8 -> 100) padded to 128: h = x @ W1^T  (f32 MXU accumulation).
    h32 = jnp.dot(xb, w1t_ref[...], preferred_element_type=jnp.float32)  # [TB,128]

    # Bias + LeakyReLU in bf16 (h must be bf16 for the second MXU pass anyway).
    # LeakyReLU(v) = max(v, 0.01*v) for slope in (0, 1); LeakyReLU(0) = 0 keeps
    # the padded hidden channels exactly zero.
    h = h32.astype(jnp.bfloat16) + b1_ref[...]
    h = jnp.maximum(h, LEAKY_SLOPE * h)                                 # [TB,128]

    # Linear(100 -> 8), NT form (contract the shared minor/lane dims):
    #   z[f, b] = sum_j W2[f, j] * h[b, j]   -> [8, TB] feature-major.
    z = lax.dot_general(w2_ref[...], h,
                        dimension_numbers=(((1,), (1,)), ((), ())),
                        preferred_element_type=jnp.float32)             # [8, TB]
    z = z + b2_ref[...]

    # Softmax over the feature axis (sublane axis, 8 entries) == torch dim=-1.
    z = z - jnp.max(z, axis=0, keepdims=True)
    e = jnp.exp(z)
    inv = pl.reciprocal(jnp.sum(e, axis=0, keepdims=True), approx=True)
    ot_ref[...] = (e * inv).astype(ot_ref.dtype)


@functools.partial(jax.jit, static_argnames=("block_batch",))
def neural_network_forward(x, w1t, b1, w2, b2, *, block_batch=16384):
    """x: [B, 8] float -> softmax probs [B, 8] float32.

    Parameters are in the kernel layout produced by `init_params`:
      w1t: [8, 128] bf16 (= W1^T, hidden padded), b1: [1, 128] bf16,
      w2:  [8, 128] bf16,                         b2: [8, 1]   f32.
    """
    B = x.shape[0]
    x = x.astype(jnp.float32)

    # Batch tile: multiple of 128 lanes, capped by block_batch, and small
    # enough to give >= 4 grid steps (2 TensorCores x >= 2 steps) when B allows.
    TB = min(_round_up(block_batch, 128), _round_up(_cdiv(B, 4), 128))
    TB = max(TB, 128)
    B_pad = _round_up(B, TB)

    # Cheap contiguous zero-pad of the rows only (no transpose, no dtype copy).
    # Padded rows produce finite softmax values and are sliced off below.
    if B_pad != B:
        x = jnp.pad(x, ((0, B_pad - B), (0, 0)))

    grid = (B_pad // TB,)
    ot = pl.pallas_call(
        _mlp_softmax_kernel,
        out_shape=jax.ShapeDtypeStruct((N_FEATURES, B_pad), jnp.bfloat16),
        grid_spec=pltpu.PrefetchScalarGridSpec(
            num_scalar_prefetch=0,
            grid=grid,
            in_specs=[
                # Activations: tiled along the batch (sublane) axis.
                pl.BlockSpec((TB, N_FEATURES), lambda i: (i, 0)),
                # Weights / biases: constant index_map -> DMA'd once, stay
                # VMEM-resident across the whole grid (< 10 KiB total).
                pl.BlockSpec((N_FEATURES, HIDDEN_PAD), lambda i: (0, 0)),
                pl.BlockSpec((1, HIDDEN_PAD), lambda i: (0, 0)),
                pl.BlockSpec((N_FEATURES, HIDDEN_PAD), lambda i: (0, 0)),
                pl.BlockSpec((N_FEATURES, 1), lambda i: (0, 0)),
            ],
            # Feature-major, lane-dense output tile.
            out_specs=pl.BlockSpec((N_FEATURES, TB), lambda i: (0, i)),
        ),
        compiler_params=pltpu.CompilerParams(
            dimension_semantics=("parallel",),        # megacore split on v7x
            vmem_limit_bytes=32 * 1024 * 1024,        # ~15-20 MiB actually used
        ),
    )(x, w1t, b1, w2, b2)

    # Back to the PyTorch-facing [B, 8] float32 layout (one fused XLA op).
    return ot[:, :B].T.astype(jnp.float32)


def init_params(key):
    """Torch-style default init (U[-1/sqrt(fan_in), +1/sqrt(fan_in)]), stored in
    the kernel layout: W1 transposed to [in, hidden_pad], hidden zero-padded
    100 -> 128, weights + b1 in bf16, b2 as an f32 column vector."""
    k1, k2, k3, k4 = jax.random.split(key, 4)
    bound1 = 1.0 / jnp.sqrt(jnp.float32(N_FEATURES))   # fan_in of Linear(8, 100)
    bound2 = 1.0 / jnp.sqrt(jnp.float32(HIDDEN))       # fan_in of Linear(100, 8)

    w1 = jax.random.uniform(k1, (HIDDEN, N_FEATURES), jnp.float32, -bound1, bound1)
    b1 = jax.random.uniform(k2, (HIDDEN,), jnp.float32, -bound1, bound1)
    w2 = jax.random.uniform(k3, (N_FEATURES, HIDDEN), jnp.float32, -bound2, bound2)
    b2 = jax.random.uniform(k4, (N_FEATURES,), jnp.float32, -bound2, bound2)

    w1t = jnp.zeros((N_FEATURES, HIDDEN_PAD), jnp.float32).at[:, :HIDDEN].set(w1.T)
    b1p = jnp.zeros((1, HIDDEN_PAD), jnp.float32).at[0, :HIDDEN].set(b1)
    w2p = jnp.zeros((N_FEATURES, HIDDEN_PAD), jnp.float32).at[:, :HIDDEN].set(w2)
    b2p = b2.reshape(N_FEATURES, 1)
    return (w1t.astype(jnp.bfloat16), b1p.astype(jnp.bfloat16),
            w2p.astype(jnp.bfloat16), b2p)


def reference_forward(x, w1t, b1, w2, b2):
    """Pure-JAX f32 reference (same padded / bf16-rounded params) for validation."""
    h = x.astype(jnp.float32) @ w1t.astype(jnp.float32) + b1.astype(jnp.float32)
    h = jnp.where(h >= 0.0, h, LEAKY_SLOPE * h)
    z = h @ w2.astype(jnp.float32).T + b2[:, 0]
    return jax.nn.softmax(z, axis=-1)


if __name__ == "__main__":
    key = jax.random.PRNGKey(0)
    kx, kx2, kp = jax.random.split(key, 3)

    w1t, b1, w2, b2 = init_params(kp)

    # Small demo batch (matches the module: n = 8 features).
    batch = 2
    x = jax.random.normal(kx, (batch, N_FEATURES), dtype=jnp.float32)
    out = neural_network_forward(x, w1t, b1, w2, b2)
    out = jax.block_until_ready(out)

    assert out.shape == (batch, N_FEATURES)
    assert bool(jnp.allclose(jnp.sum(out, axis=-1), 1.0, atol=1e-2))
    ref = reference_forward(x, w1t, b1, w2, b2)
    assert bool(jnp.allclose(out, ref, atol=2e-2)), (out, ref)

    # Second check: a batch that exercises a multi-step grid and ragged padding.
    batch2 = 1000
    x2 = jax.random.normal(kx2, (batch2, N_FEATURES), dtype=jnp.float32)
    out2 = jax.block_until_ready(neural_network_forward(x2, w1t, b1, w2, b2))
    ref2 = reference_forward(x2, w1t, b1, w2, b2)
    assert out2.shape == (batch2, N_FEATURES)
    assert bool(jnp.allclose(out2, ref2, atol=2e-2))

    print("KERNEL_OK")
</pallas_src>

<mosaic_0001>
module attributes {stable_mosaic.version = 11 : i64} {
  func.func @_mlp_softmax_kernel(%arg0: i32, %arg1: memref<128x8xf32, #tpu.memory_space<vmem>>, %arg2: memref<8x128xbf16, #tpu.memory_space<vmem>>, %arg3: memref<1x128xbf16, #tpu.memory_space<vmem>>, %arg4: memref<8x128xbf16, #tpu.memory_space<vmem>>, %arg5: memref<8x1xf32, #tpu.memory_space<vmem>>, %arg6: memref<8x128xbf16, #tpu.memory_space<vmem>>) attributes {dimension_semantics = [#tpu.dimension_semantics<parallel>], iteration_bounds = array<i64: 1>, scalar_prefetch = 0 : i64, scratch_operands = 0 : i64, tpu.core_type = #tpu.core_type<tc>, window_params = [{transform_indices = @transform_0, window_bounds = array<i64: 128, 8>}, {pipeline_mode = #tpu.pipeline_mode<synchronous>, transform_indices = @transform_1, window_bounds = array<i64: 8, 128>}, {pipeline_mode = #tpu.pipeline_mode<synchronous>, transform_indices = @transform_2, window_bounds = array<i64: 1, 128>}, {pipeline_mode = #tpu.pipeline_mode<synchronous>, transform_indices = @transform_3, window_bounds = array<i64: 8, 128>}, {pipeline_mode = #tpu.pipeline_mode<synchronous>, transform_indices = @transform_4, window_bounds = array<i64: 8, 1>}, {transform_indices = @transform_5, window_bounds = array<i64: 8, 128>}]} {
    %c0 = arith.constant 0 : index
    %c0_0 = arith.constant 0 : index
    %0 = vector.load %arg1[%c0, %c0_0] : memref<128x8xf32, #tpu.memory_space<vmem>>, vector<128x8xf32>
    %1 = arith.truncf %0 : vector<128x8xf32> to vector<128x8xbf16>
    %c0_1 = arith.constant 0 : index
    %c0_2 = arith.constant 0 : index
    %2 = vector.load %arg2[%c0_1, %c0_2] : memref<8x128xbf16, #tpu.memory_space<vmem>>, vector<8x128xbf16>
    %cst = arith.constant dense<0.000000e+00> : vector<128x128xf32>
    %3 = tpu.matmul %1, %2, %cst {dimension_numbers = #tpu.dot_dimension_numbers<[1], [0], [0], [1], [0, 0, 1, 1], [], []>} : vector<128x8xbf16>, vector<8x128xbf16>, vector<128x128xf32> -> vector<128x128xf32>
    %4 = arith.truncf %3 : vector<128x128xf32> to vector<128x128xbf16>
    %c0_3 = arith.constant 0 : index
    %c0_4 = arith.constant 0 : index
    %5 = vector.load %arg3[%c0_3, %c0_4] : memref<1x128xbf16, #tpu.memory_space<vmem>>, vector<1x128xbf16>
    %6 = vector.broadcast %5 : vector<1x128xbf16> to vector<128x128xbf16>
    %7 = arith.addf %4, %6 : vector<128x128xbf16>
    %cst_5 = arith.constant 1.000980e-02 : bf16
    %8 = vector.broadcast %cst_5 : bf16 to vector<128x128xbf16>
    %9 = arith.mulf %8, %7 : vector<128x128xbf16>
    %10 = arith.maximumf %7, %9 : vector<128x128xbf16>
    %c0_6 = arith.constant 0 : index
    %c0_7 = arith.constant 0 : index
    %11 = vector.load %arg4[%c0_6, %c0_7] : memref<8x128xbf16, #tpu.memory_space<vmem>>, vector<8x128xbf16>
    %cst_8 = arith.constant dense<0.000000e+00> : vector<8x128xf32>
    %12 = tpu.matmul %11, %10, %cst_8 {dimension_numbers = #tpu.dot_dimension_numbers<[1], [1], [0], [0], [0, 0, 1, 0], [], []>} : vector<8x128xbf16>, vector<128x128xbf16>, vector<8x128xf32> -> vector<8x128xf32>
    %c0_9 = arith.constant 0 : index
    %c0_10 = arith.constant 0 : index
    %13 = vector.load %arg5[%c0_9, %c0_10] : memref<8x1xf32, #tpu.memory_space<vmem>>, vector<8x1xf32>
    %14 = vector.broadcast %13 : vector<8x1xf32> to vector<8x128xf32>
    %15 = arith.addf %12, %14 : vector<8x128xf32>
    %cst_11 = arith.constant dense<0xFF800000> : vector<128xf32>
    %16 = vector.multi_reduction <maximumf>, %15, %cst_11 [0] : vector<8x128xf32> to vector<128xf32>
    %17 = vector.shape_cast %16 : vector<128xf32> to vector<1x128xf32>
    %18 = vector.broadcast %17 : vector<1x128xf32> to vector<8x128xf32>
    %19 = arith.subf %15, %18 : vector<8x128xf32>
    %20 = math.exp %19 : vector<8x128xf32>
    %cst_12 = arith.constant dense<0.000000e+00> : vector<128xf32>
    %21 = vector.multi_reduction <add>, %20, %cst_12 [0] : vector<8x128xf32> to vector<128xf32>
    %22 = vector.shape_cast %21 : vector<128xf32> to vector<1x128xf32>
    %23 = tpu.reciprocal %22 {approx = true} : vector<1x128xf32> -> vector<1x128xf32>
    %24 = vector.broadcast %23 : vector<1x128xf32> to vector<8x128xf32>
    %25 = arith.mulf %20, %24 : vector<8x128xf32>
    %26 = arith.truncf %25 : vector<8x128xf32> to vector<8x128xbf16>
    %c0_13 = arith.constant 0 : index
    %c0_14 = arith.constant 0 : index
    %27 = vector.load %arg6[%c0_13, %c0_14] : memref<8x128xbf16, #tpu.memory_space<vmem>>, vector<8x128xbf16>
    tpu.vector_store %arg6[%c0_13, %c0_14], %26 {strides = array<i32>} : memref<8x128xbf16, #tpu.memory_space<vmem>>, vector<8x128xbf16>,
    return
  }
  func.func @transform_0(%arg0: i32) -> (i32, i32) {
    %c0_i32 = arith.constant 0 : i32
    %c0_i32_0 = arith.constant 0 : i32
    return %arg0, %c0_i32 : i32, i32
  }
  func.func @transform_1(%arg0: i32) -> (i32, i32) {
    %c0_i32 = arith.constant 0 : i32
    %c0_i32_0 = arith.constant 0 : i32
    %c0_i32_1 = arith.constant 0 : i32
    return %c0_i32, %c0_i32_0 : i32, i32
  }
  func.func @transform_2(%arg0: i32) -> (i32, i32) {
    %c0_i32 = arith.constant 0 : i32
    %c0_i32_0 = arith.constant 0 : i32
    %c0_i32_1 = arith.constant 0 : i32
    return %c0_i32, %c0_i32_0 : i32, i32
  }
  func.func @transform_3(%arg0: i32) -> (i32, i32) {
    %c0_i32 = arith.constant 0 : i32
    %c0_i32_0 = arith.constant 0 : i32
    %c0_i32_1 = arith.constant 0 : i32
    return %c0_i32, %c0_i32_0 : i32, i32
  }
  func.func @transform_4(%arg0: i32) -> (i32, i32) {
    %c0_i32 = arith.constant 0 : i32
    %c0_i32_0 = arith.constant 0 : i32
    %c0_i32_1 = arith.constant 0 : i32
    return %c0_i32, %c0_i32_0 : i32, i32
  }
  func.func @transform_5(%arg0: i32) -> (i32, i32) {
    %c0_i32 = arith.constant 0 : i32
    %c0_i32_0 = arith.constant 0 : i32
    return %c0_i32, %arg0 : i32, i32
  }
}

</mosaic_0001>

<llo_original>
// kernel: neural_network_forward.1
$region0: #{neural_network_forward.1}
  #allocation0 [shape = 'u32[]', space=smem, size = 0x4, offset = 0x4, fixed_abs, tag = 'smem constant byte address 0x4 - core index']
  #allocation1 [shape = 'u32[144,128]{1,0:T(1,128)}', space=vmem, size = 0x12000, scoped, tag = 'internal scratch']
  %s0 = inlined_call_operand.vmem [shape: f32[128,8], index: 0, kind: input, shape index: {}]
  %s1 = inlined_call_operand.vmem [shape: bf16[8,128], index: 1, kind: input, shape index: {}]
  %s2 = inlined_call_operand.vmem [shape: bf16[1,128], index: 2, kind: input, shape index: {}]
  %s3 = inlined_call_operand.vmem [shape: bf16[8,128], index: 3, kind: input, shape index: {}]
  %s4 = inlined_call_operand.vmem [shape: f32[8,1], index: 4, kind: input, shape index: {}]
  %s5 = inlined_call_operand.vmem [shape: bf16[8,128], index: 5, kind: output, shape index: {}]
  %s6 = sld [smem:[#allocation0]]
  $region30: #{neural_network_forward.1} parent=0
    _
  %s8 = ssub.s32 1, %s6
  %s9 = scalar_select 0, %s8, %s6
  // Predicated region
  $region2: #{neural_network_forward.1} parent=0 // pred_check
    _
  $region3: #{neural_network_forward.1} parent=0 // pred_check_branch
    %11 = sbr.rel (0) target = $region5
  $region4: #{neural_network_forward.1} parent=0 // pred_region
    _
  $region5: #{neural_network_forward.1} parent=0 // pred_fallthru
    _
  // Predicated region
  $region6: #{neural_network_forward.1} parent=0 // pred_check
    _
  $region7: #{neural_network_forward.1} parent=0 // pred_check_branch
    %13 = sbr.rel (0) target = $region9
  $region8: #{neural_network_forward.1} parent=0 // pred_region
    _
  $region9: #{neural_network_forward.1} parent=0 // pred_fallthru
    _
  // Predicated region
  $region10: #{neural_network_forward.1} parent=0 // pred_check
    _
  $region11: #{neural_network_forward.1} parent=0 // pred_check_branch
    %15 = sbr.rel (0) target = $region13
  $region12: #{neural_network_forward.1} parent=0 // pred_region
    _
  $region13: #{neural_network_forward.1} parent=0 // pred_fallthru
    _
  // Predicated region
  $region14: #{neural_network_forward.1} parent=0 // pred_check
    _
  $region15: #{neural_network_forward.1} parent=0 // pred_check_branch
    %17 = sbr.rel (0) target = $region17
  $region16: #{neural_network_forward.1} parent=0 // pred_region
    _
  $region17: #{neural_network_forward.1} parent=0 // pred_fallthru
    _
  // Predicated region
  $region18: #{neural_network_forward.1} parent=0 // pred_check
    _
  $region19: #{neural_network_forward.1} parent=0 // pred_check_branch
    %19 = sbr.rel (0) target = $region21
  $region20: #{neural_network_forward.1} parent=0 // pred_region
    _
  $region21: #{neural_network_forward.1} parent=0 // pred_fallthru
    _
  %v22 = vld [vmem:[%s0] sm:$0xff]
  %v23 = vld [vmem:[%s0 + $0x8] sm:$0xff]
  %v24 = vld [vmem:[%s0 + $0x10] sm:$0xff]
  %v25 = vld [vmem:[%s0 + $0x18] sm:$0xff]
  %v26 = vld [vmem:[%s0 + $0x20] sm:$0xff]
  %v27 = vld [vmem:[%s0 + $0x28] sm:$0xff]
  %v28 = vld [vmem:[%s0 + $0x30] sm:$0xff]
  %v29 = vld [vmem:[%s0 + $0x38] sm:$0xff]
  %v30 = vld [vmem:[%s0 + $0x40] sm:$0xff]
  %v31 = vld [vmem:[%s0 + $0x48] sm:$0xff]
  %v32 = vld [vmem:[%s0 + $0x50] sm:$0xff]
  %v33 = vld [vmem:[%s0 + $0x58] sm:$0xff]
  %v34 = vld [vmem:[%s0 + $0x60] sm:$0xff]
  %v35 = vld [vmem:[%s0 + $0x68] sm:$0xff]
  %v36 = vld [vmem:[%s0 + $0x70] sm:$0xff]
  %v37 = vld [vmem:[%s0 + $0x78] sm:$0xff]
  %v38 = vpack.c.bf16 %v23, %v22
  %v39 = vpack.c.bf16 %v25, %v24
  %v40 = vpack.c.bf16 %v27, %v26
  %v41 = vpack.c.bf16 %v29, %v28
  %v42 = vpack.c.bf16 %v31, %v30
  %v43 = vpack.c.bf16 %v33, %v32
  %v44 = vpack.c.bf16 %v35, %v34
  %v45 = vpack.c.bf16 %v37, %v36
  %v46 = vld [vmem:[%s1] sm:$0xf]
  %vm47 = vcmask 64512
  %v49 = vsel %vm47, %v38, 0
  %v52 = vsel %vm47, %v39, 0
  %v55 = vsel %vm47, %v40, 0
  %v58 = vsel %vm47, %v41, 0
  %v61 = vsel %vm47, %v42, 0
  %v64 = vsel %vm47, %v43, 0
  %v67 = vsel %vm47, %v44, 0
  %v70 = vsel %vm47, %v45, 0
  %vm72 = vcmask 1043456
  %v74 = vsel %vm72, %v46, 0
  %76 = vmatprep.subr.bf16.mxu0 0
  %77 = vmatpush1.bf16.msra.mxu0 %v74
  %78 = vmatprep.subr.bf16.mxu0 0
  %79 = vmatpush1.bf16.msra.mxu0 0
  %80 = vmatprep.subr.bf16.mxu0 0
  %81 = vmatpush1.bf16.msra.mxu0 0
  %82 = vmatprep.subr.bf16.mxu0 0
  %83 = vmatpush1.bf16.msra.mxu0 0
  %84 = vmatprep.subr.bf16.mxu0 0
  %85 = vmatpush1.bf16.msra.mxu0 0
  %86 = vmatprep.subr.bf16.mxu0 0
  %87 = vmatpush1.bf16.msra.mxu0 0
  %88 = vmatprep.subr.bf16.mxu0 0
  %89 = vmatpush1.bf16.msra.mxu0 0
  %90 = vmatprep.subr.bf16.mxu0 0
  %91 = vmatpush1.bf16.msra.mxu0 0
  %92 = vmatprep.subr.bf16.mxu0 0
  %93 = vmatpush1.bf16.msra.mxu0 0
  %94 = vmatprep.subr.bf16.mxu0 0
  %95 = vmatpush1.bf16.msra.mxu0 0
  %96 = vmatprep.subr.bf16.mxu0 0
  %97 = vmatpush1.bf16.msra.mxu0 0
  %98 = vmatprep.subr.bf16.mxu0 0
  %99 = vmatpush1.bf16.msra.mxu0 0
  %100 = vmatprep.subr.bf16.mxu0 0
  %101 = vmatpush1.bf16.msra.mxu0 0
  %102 = vmatprep.subr.bf16.mxu0 0
  %103 = vmatpush1.bf16.msra.mxu0 0
  %104 = vmatprep.subr.bf16.mxu0 0
  %105 = vmatpush1.bf16.msra.mxu0 0
  %106 = vmatprep.subr.bf16.mxu0 0
  %107 = vmatpush1.bf16.msra.mxu0 0
  %108 = vmatprep.mubr.bf16.mxu0 0
  %109 = vmatmul.mubr.bf16.gmra.mrb[0].mxu0 %v49
  %v110 = vpop.f32.mrb[0].mxu0
  %v111 = vadd.f32 0.0, %v110
  %v112 = vpop.f32.mrb[0].mxu0
  %v113 = vpop.f32.mrb[0].mxu0
  %v114 = vadd.f32 0.0, %v113
  %v115 = vpop.f32.mrb[0].mxu0
  %116 = vmatprep.mubr.bf16.mxu0 0
  %117 = vmatmul.mubr.bf16.gmra.mrb[0].mxu0 %v52
  %v118 = vpop.f32.mrb[0].mxu0
  %v119 = vadd.f32 0.0, %v118
  %v120 = vpop.f32.mrb[0].mxu0
  %v121 = vpop.f32.mrb[0].mxu0
  %v122 = vadd.f32 0.0, %v121
  %v123 = vpop.f32.mrb[0].mxu0
  %124 = vmatprep.mubr.bf16.mxu0 0
  %125 = vmatmul.mubr.bf16.gmra.mrb[0].mxu0 %v55
  %v126 = vpop.f32.mrb[0].mxu0
  %v127 = vadd.f32 0.0, %v126
  %v128 = vpop.f32.mrb[0].mxu0
  %v129 = vpop.f32.mrb[0].mxu0
  %v130 = vadd.f32 0.0, %v129
  %v131 = vpop.f32.mrb[0].mxu0
  %132 = vmatprep.mubr.bf16.mxu0 0
  %133 = vmatmul.mubr.bf16.gmra.mrb[0].mxu0 %v58
  %v134 = vpop.f32.mrb[0].mxu0
  %v135 = vadd.f32 0.0, %v134
  %v136 = vpop.f32.mrb[0].mxu0
  %v137 = vpop.f32.mrb[0].mxu0
  %v138 = vadd.f32 0.0, %v137
  %v139 = vpop.f32.mrb[0].mxu0
  %140 = vmatprep.mubr.bf16.mxu0 0
  %141 = vmatmul.mubr.bf16.gmra.mrb[0].mxu0 %v61
  %v142 = vpop.f32.mrb[0].mxu0
  %v143 = vadd.f32 0.0, %v142
  %v144 = vpop.f32.mrb[0].mxu0
  %v145 = vpop.f32.mrb[0].mxu0
  %v146 = vadd.f32 0.0, %v145
  %v147 = vpop.f32.mrb[0].mxu0
  %148 = vmatprep.mubr.bf16.mxu0 0
  %149 = vmatmul.mubr.bf16.gmra.mrb[0].mxu0 %v64
  %v150 = vpop.f32.mrb[0].mxu0
  %v151 = vadd.f32 0.0, %v150
  %v152 = vpop.f32.mrb[0].mxu0
  %v153 = vpop.f32.mrb[0].mxu0
  %v154 = vadd.f32 0.0, %v153
  %v155 = vpop.f32.mrb[0].mxu0
  %156 = vmatprep.mubr.bf16.mxu0 0
  %157 = vmatmul.mubr.bf16.gmra.mrb[0].mxu0 %v67
  %v158 = vpop.f32.mrb[0].mxu0
  %v159 = vadd.f32 0.0, %v158
  %v160 = vpop.f32.mrb[0].mxu0
  %v161 = vpop.f32.mrb[0].mxu0
  %v162 = vadd.f32 0.0, %v161
  %v163 = vpop.f32.mrb[0].mxu0
  %164 = vmatprep.mubr.bf16.mxu0 0
  %165 = vmatmul.mubr.bf16.gmra.mrb[0].mxu0 %v70
  %v166 = vpop.f32.mrb[0].mxu0
  %v167 = vadd.f32 0.0, %v166
  %v168 = vpop.f32.mrb[0].mxu0
  %v169 = vpop.f32.mrb[0].mxu0
  %v170 = vadd.f32 0.0, %v169
  %v171 = vpop.f32.mrb[0].mxu0
  %172 = vdwg.mxu0
  %v173 = vpack.c.bf16 %v114, %v111
  %v174 = vpack.c.bf16 %v122, %v119
  %v175 = vpack.c.bf16 %v130, %v127
  %v176 = vpack.c.bf16 %v138, %v135
  %v177 = vpack.c.bf16 %v146, %v143
  %v178 = vpack.c.bf16 %v154, %v151
  %v179 = vpack.c.bf16 %v162, %v159
  %v180 = vpack.c.bf16 %v170, %v167
  %v181 = vld [vmem:[%s2] sm:$0x1]
  %v183 = vpack.i.b16 %v181, %v181
  %v185 = vlaneseq
  %v186 = vshrl.u32 %v185, 7
  %v187 = vsub.s32 0, %v186
  %v188 = vrot.slane %v183, %v187
  %v189 = vadd.bf16 %v173, %v188
  %v190 = vadd.bf16 %v174, %v188
  %v191 = vadd.bf16 %v175, %v188
  %v192 = vadd.bf16 %v176, %v188
  %v193 = vadd.bf16 %v177, %v188
  %v194 = vadd.bf16 %v178, %v188
  %v195 = vadd.bf16 %v179, %v188
  %v196 = vadd.bf16 %v180, %v188
  %v197 = vmul.bf16 %v189, 1009007652
  %v198 = vmul.bf16 %v190, 1009007652
  %v199 = vmul.bf16 %v191, 1009007652
  %v200 = vmul.bf16 %v192, 1009007652
  %v201 = vmul.bf16 %v193, 1009007652
  %v202 = vmul.bf16 %v194, 1009007652
  %v203 = vmul.bf16 %v195, 1009007652
  %v204 = vmul.bf16 %v196, 1009007652
  %v205 = vmax.bf16 %v189, %v197
  %v206 = vmax.bf16 %v190, %v198
  %v207 = vmax.bf16 %v191, %v199
  %v208 = vmax.bf16 %v192, %v200
  %v209 = vmax.bf16 %v193, %v201
  %v210 = vmax.bf16 %v194, %v202
  %v211 = vmax.bf16 %v195, %v203
  %v212 = vmax.bf16 %v196, %v204
  %v213 = vld [vmem:[%s3] sm:$0xf]
  %v214 = vld [vmem:[%s4] sm:$0xff]
  %216 = vset.pattern.permute.xlu0 0
  %217 = vperm.xlu0 %216, %v214
  %v218 = vpop.permute.xlu0 %217
  %220 = vmatprep.subr.bf16.mxu0 0
  %221 = vmatpush1.bf16.xpose.msra.mxu0 %v205
  %222 = vmatprep.subr.bf16.mxu0 0
  %223 = vmatpush1.bf16.xpose.msra.mxu0 %v206
  %224 = vmatprep.subr.bf16.mxu0 0
  %225 = vmatpush1.bf16.xpose.msra.mxu0 %v207
  %226 = vmatprep.subr.bf16.mxu0 0
  %227 = vmatpush1.bf16.xpose.msra.mxu0 %v208
  %228 = vmatprep.subr.bf16.mxu0 0
  %229 = vmatpush1.bf16.xpose.msra.mxu0 %v209
  %230 = vmatprep.subr.bf16.mxu0 0
  %231 = vmatpush1.bf16.xpose.msra.mxu0 %v210
  %232 = vmatprep.subr.bf16.mxu0 0
  %233 = vmatpush1.bf16.xpose.msra.mxu0 %v211
  %234 = vmatprep.subr.bf16.mxu0 0
  %235 = vmatpush1.bf16.xpose.msra.mxu0 %v212
  %236 = vmatprep.subr.bf16.mxu0 0
  %237 = vmatpush1.bf16.xpose.msra.mxu0 0
  %238 = vmatprep.subr.bf16.mxu0 0
  %239 = vmatpush1.bf16.xpose.msra.mxu0 0
  %240 = vmatprep.subr.bf16.mxu0 0
  %241 = vmatpush1.bf16.xpose.msra.mxu0 0
  %242 = vmatprep.subr.bf16.mxu0 0
  %243 = vmatpush1.bf16.xpose.msra.mxu0 0
  %244 = vmatprep.subr.bf16.mxu0 0
  %245 = vmatpush1.bf16.xpose.msra.mxu0 0
  %246 = vmatprep.subr.bf16.mxu0 0
  %247 = vmatpush1.bf16.xpose.msra.mxu0 0
  %248 = vmatprep.subr.bf16.mxu0 0
  %249 = vmatpush1.bf16.xpose.msra.mxu0 0
  %250 = vmatprep.subr.bf16.mxu0 0
  %251 = vmatpush1.bf16.xpose.msra.mxu0 0
  %252 = vmatprep.mubr.bf16.mxu0 0
  %253 = vmatmul.mubr.bf16.gmra.mrb[0].mxu0 %v213
  %v254 = vpop.f32.mrb[0].mxu0
  %v255 = vadd.f32 %v218, %v254
  %v256 = vpop.f32.mrb[0].mxu0
  %v257 = vpop.f32.mrb[0].mxu0
  %v258 = vpop.f32.mrb[0].mxu0
  %259 = vdwg.mxu0
  %v260 = vrot.slane %v255, 4
  %v261 = vmax.f32 %v255, %v260
  %v262 = vrot.slane %v261, 2
  %v263 = vmax.f32 %v261, %v262
  %v264 = vrot.slane %v263, 1
  %v265 = vmax.f32 %v263, %v264
  %v266 = vsub.f32 %v255, %v265
  %v267 = vmul.f32 %v266, 1.442695
  %v268 = vpow.pop %v267
  %v269 = vrot.slane %v268, 4
  %v270 = vadd.f32 %v268, %v269
  %v271 = vrot.slane %v270, 2
  %v272 = vadd.f32 %v270, %v271
  %v273 = vrot.slane %v272, 1
  %v274 = vadd.f32 %v272, %v273
  %v275 = vrcp.pop %v274
  %v276 = vmul.f32 %v268, %v275
  %v277 = vpack.c.bf16 %v276, %v276
  %278 = vst [vmem:[%s5] sm:$0xf] %v277
  // Predicated region
  $region22: #{neural_network_forward.1} parent=0 // pred_check
    _
  $region23: #{neural_network_forward.1} parent=0 // pred_check_branch
    %280 = sbr.rel (0) target = $region25
  $region24: #{neural_network_forward.1} parent=0 // pred_region
    _
  $region25: #{neural_network_forward.1} parent=0 // pred_fallthru
    _
  // Predicated region
  $region26: #{neural_network_forward.1} parent=0 // pred_check
    _
  $region27: #{neural_network_forward.1} parent=0 // pred_check_branch
    %282 = sbr.rel (0) target = $region29
  $region28: #{neural_network_forward.1} parent=0 // pred_region
    _
  $region29: #{neural_network_forward.1} parent=0 // pred_fallthru
    _

</llo_original>
